<compile_context>
chip_gen: v7x
topology: tpu7x:2x2x1
jax: 0.10.0
libtpu: 0.0.40
codegen_flags: <defaults>
</compile_context>

<pallas_src>
import jax
import jax.numpy as jnp
from jax.experimental import pallas as pl
from jax.experimental.pallas import tpu as pltpu

IN_FEATURES = 256    # K
OUT_FEATURES = 255   # N (nn.Linear out_features)


def _round_up(x, m):
    return (x + m - 1) // m * m


def encoder(x):
    # TODO(synk): `encoder` is a user-provided submodule in FSProbe.__init__
    # and is not defined by the reference code; identity is used here.
    return x


def fsprobe_linear_kernel(x_ref, w_ref, b_ref, o_ref):
    # y = x @ W + b. x is cast in-kernel to the compute dtype (= w's dtype,
    # bf16 by default); MXU accumulates in f32; bias add stays in f32 (VPU).
    x = x_ref[...].astype(w_ref.dtype)
    acc = jnp.dot(x, w_ref[...], preferred_element_type=jnp.float32)
    o_ref[...] = (acc + b_ref[...]).astype(o_ref.dtype)


def fsprobe_forward(x, w, b, *, tm=2048, compute_dtype=jnp.bfloat16,
                    out_dtype=jnp.float32):
    """FSProbe.forward: x (..., 256) -> (..., 255).

    w: (IN_FEATURES, OUT_FEATURES)  -- transpose of the PyTorch weight
    b: (OUT_FEATURES,)
    """
    feats = encoder(x)
    lead = feats.shape[:-1]
    m = 1
    for d in lead:
        m *= d

    if m == 0:  # empty-input edge case: nothing to compute
        return jnp.zeros((*lead, OUT_FEATURES), dtype=out_dtype)

    x2 = feats.reshape(m, IN_FEATURES)

    # Row tile: large for roofline efficiency, but
    #   - never bigger than the 8-aligned problem (tiny inputs), and
    #   - at most ceil(m/2) (8-aligned) when m > 8, so the row grid has >= 2
    #     steps and "parallel" semantics can shard across both v7x TCs.
    if m > 8:
        cap = _round_up(pl.cdiv(m, 2), 8)
    else:
        cap = _round_up(m, 8)
    tm_eff = max(8, min(tm, cap))
    grid = (pl.cdiv(m, tm_eff),)

    # Weights/bias are tiny and reused by every grid step: one-time cast of W
    # to the compute dtype is negligible; bias stays f32 for the f32 bias add.
    w_c = w.astype(compute_dtype)
    b_c = b.reshape(1, OUT_FEATURES).astype(jnp.float32)

    cost = pl.CostEstimate(
        flops=2 * m * IN_FEATURES * OUT_FEATURES,
        transcendentals=0,
        bytes_accessed=(m * IN_FEATURES * x2.dtype.itemsize
                        + IN_FEATURES * OUT_FEATURES * w_c.dtype.itemsize
                        + OUT_FEATURES * 4
                        + m * OUT_FEATURES * jnp.dtype(out_dtype).itemsize),
    )

    out = pl.pallas_call(
        fsprobe_linear_kernel,
        out_shape=jax.ShapeDtypeStruct((m, OUT_FEATURES), out_dtype),
        grid_spec=pl.GridSpec(
            grid=grid,
            in_specs=[
                # activations: tile rows, full feature dim (ragged last block
                # is masked by Pallas; garbage rows are never stored)
                pl.BlockSpec((tm_eff, IN_FEATURES), lambda i: (i, 0)),
                # weights: whole (K, N) block; constant index_map -> DMA'd
                # once and held resident across the grid
                pl.BlockSpec((IN_FEATURES, OUT_FEATURES), lambda i: (0, 0)),
                # bias: (1, N) broadcast row, also resident
                pl.BlockSpec((1, OUT_FEATURES), lambda i: (0, 0)),
            ],
            out_specs=pl.BlockSpec((tm_eff, OUT_FEATURES), lambda i: (i, 0)),
        ),
        compiler_params=pltpu.CompilerParams(
            dimension_semantics=("parallel",),
        ),
        cost_estimate=cost,
    )(x2, w_c, b_c)

    return out.reshape(*lead, OUT_FEATURES)


if __name__ == "__main__":
    key = jax.random.PRNGKey(0)
    kx, kw, kb = jax.random.split(key, 3)

    # Small shapes consistent with Linear(256 -> 255): batch=2, seq=8, hidden=256
    x = jax.random.normal(kx, (2, 8, IN_FEATURES), dtype=jnp.float32)

    # Deterministic nn.Linear-style init: U(-1/sqrt(in), 1/sqrt(in))
    bound = 1.0 / (IN_FEATURES ** 0.5)
    w = jax.random.uniform(
        kw, (IN_FEATURES, OUT_FEATURES), minval=-bound, maxval=bound,
        dtype=jnp.float32)                       # (in, out) = W_pt.T
    b = jax.random.uniform(
        kb, (OUT_FEATURES,), minval=-bound, maxval=bound, dtype=jnp.float32)

    y = fsprobe_forward(x, w, b)
    y = jax.block_until_ready(y)

    # Reference check against plain-JAX f32 Linear (tolerance relaxed for the
    # bf16-operand / f32-accumulate compute path).
    y_ref = encoder(x) @ w + b
    assert y.shape == (2, 8, OUT_FEATURES)
    assert jnp.allclose(y, y_ref, atol=2e-2, rtol=2e-2)

    print("KERNEL_OK")
</pallas_src>

<mosaic_0001>
module attributes {stable_mosaic.version = 11 : i64} {
  func.func @fsprobe_linear_kernel(%arg0: i32, %arg1: memref<8x256xf32, #tpu.memory_space<vmem>>, %arg2: memref<256x255xbf16, #tpu.memory_space<vmem>>, %arg3: memref<1x255xf32, #tpu.memory_space<vmem>>, %arg4: memref<8x255xf32, #tpu.memory_space<vmem>>) attributes {dimension_semantics = [#tpu.dimension_semantics<parallel>], iteration_bounds = array<i64: 2>, scalar_prefetch = 0 : i64, scratch_operands = 0 : i64, tpu.core_type = #tpu.core_type<tc>, window_params = [{transform_indices = @transform_0, window_bounds = array<i64: 8, 256>}, {pipeline_mode = #tpu.pipeline_mode<synchronous>, transform_indices = @transform_1, window_bounds = array<i64: 256, 255>}, {pipeline_mode = #tpu.pipeline_mode<synchronous>, transform_indices = @transform_2, window_bounds = array<i64: 1, 255>}, {transform_indices = @transform_3, window_bounds = array<i64: 8, 255>}]} {
    %c0 = arith.constant 0 : index
    %c0_0 = arith.constant 0 : index
    %0 = vector.load %arg1[%c0, %c0_0] : memref<8x256xf32, #tpu.memory_space<vmem>>, vector<8x256xf32>
    %1 = arith.truncf %0 : vector<8x256xf32> to vector<8x256xbf16>
    %c0_1 = arith.constant 0 : index
    %c0_2 = arith.constant 0 : index
    %2 = vector.load %arg2[%c0_1, %c0_2] : memref<256x255xbf16, #tpu.memory_space<vmem>>, vector<256x255xbf16>
    %cst = arith.constant dense<0.000000e+00> : vector<8x255xf32>
    %3 = tpu.matmul %1, %2, %cst {dimension_numbers = #tpu.dot_dimension_numbers<[1], [0], [0], [1], [0, 0, 1, 1], [], []>} : vector<8x256xbf16>, vector<256x255xbf16>, vector<8x255xf32> -> vector<8x255xf32>
    %c0_3 = arith.constant 0 : index
    %c0_4 = arith.constant 0 : index
    %4 = vector.load %arg3[%c0_3, %c0_4] : memref<1x255xf32, #tpu.memory_space<vmem>>, vector<1x255xf32>
    %5 = vector.broadcast %4 : vector<1x255xf32> to vector<8x255xf32>
    %6 = arith.addf %3, %5 : vector<8x255xf32>
    %c0_5 = arith.constant 0 : index
    %c0_6 = arith.constant 0 : index
    %7 = vector.load %arg4[%c0_5, %c0_6] : memref<8x255xf32, #tpu.memory_space<vmem>>, vector<8x255xf32>
    tpu.vector_store %arg4[%c0_5, %c0_6], %6 {strides = array<i32>} : memref<8x255xf32, #tpu.memory_space<vmem>>, vector<8x255xf32>,
    return
  }
  func.func @transform_0(%arg0: i32) -> (i32, i32) {
    %c0_i32 = arith.constant 0 : i32
    %c0_i32_0 = arith.constant 0 : i32
    return %arg0, %c0_i32 : i32, i32
  }
  func.func @transform_1(%arg0: i32) -> (i32, i32) {
    %c0_i32 = arith.constant 0 : i32
    %c0_i32_0 = arith.constant 0 : i32
    %c0_i32_1 = arith.constant 0 : i32
    return %c0_i32, %c0_i32_0 : i32, i32
  }
  func.func @transform_2(%arg0: i32) -> (i32, i32) {
    %c0_i32 = arith.constant 0 : i32
    %c0_i32_0 = arith.constant 0 : i32
    %c0_i32_1 = arith.constant 0 : i32
    return %c0_i32, %c0_i32_0 : i32, i32
  }
  func.func @transform_3(%arg0: i32) -> (i32, i32) {
    %c0_i32 = arith.constant 0 : i32
    %c0_i32_0 = arith.constant 0 : i32
    return %arg0, %c0_i32 : i32, i32
  }
}

</mosaic_0001>

<llo_original>
// kernel: tpu_custom_call.1
$region0: #{tpu_custom_call.1}
  #allocation0 [shape = 'u32[]', space=smem, size = 0x4, offset = 0x4, fixed_abs, tag = 'smem constant byte address 0x4 - core index']
  #allocation1 [shape = 'u32[144,128]{1,0:T(1,128)}', space=vmem, size = 0x12000, scoped, tag = 'internal scratch']
  %s0 = inlined_call_operand.hbm [shape: f32[16,256], index: 0, kind: input, shape index: {}]
  %s1 = inlined_call_operand.hbm [shape: bf16[256,255], index: 1, kind: input, shape index: {}]
  %s2 = inlined_call_operand.vmem [shape: f32[1,255], index: 2, kind: input, shape index: {}]
  %s3 = inlined_call_operand.hbm [shape: f32[16,255], index: 3, kind: output, shape index: {}]
  %s4 = sld [smem:[#allocation0]]
  $region53: #{tpu_custom_call.1} parent=0
    _
  %s6 = ssub.s32 1, %s4
  %s7 = scalar_select 0, %s6, %s4
  $region1: #{tpu_custom_call.1} parent=0
    #allocation2 [shape = 'u8[16384]{0}', space=vmem, size = 0x4000, scoped, tag = 'input window, operand 0']
    #allocation3 [shape = 's32[2]{0}', space=sflag, size = 0x8, scoped, tag = 'scoped memory for tpu_custom_call.1']
    #allocation4 [shape = 's32[2]{0}', space=sflag, size = 0x8, scoped, tag = 'scoped memory for tpu_custom_call.1']
    #allocation5 [shape = 'u8[131072]{0}', space=vmem, size = 0x20000, scoped, tag = 'input window, operand 1, single buffered']
    #allocation6 [shape = 's32[1]{0}', space=sflag, size = 0x4, scoped, tag = 'scoped memory for tpu_custom_call.1']
    #allocation7 [shape = 'u8[16384]{0}', space=vmem, size = 0x4000, scoped, tag = 'output window, operand 0']
    %8 = vsyncpa [#allocation3], 0
    %s9 = scalar_lea.sflag [#allocation3], 1
    %10 = vsyncpa %s9, 0
    %11 = vsyncpa [#allocation6], 0
    %12 = vsyncpa [#allocation4], 0
    %s13 = scalar_lea.sflag [#allocation4], 1
    %14 = vsyncpa %s13, 0
    loop: start=0, step=1, limit=4
    $region2: #{tpu_custom_call.1} parent=1 // loop_pre_header
      _
    $region3: #{tpu_custom_call.1} parent=1 // loop_header
      %s16 = sphi 0, %s20
      %p17 = scmp.ge.s32.totalorder %s16, 4
      %s26 = sphi 0, %s28
      %s29 = sphi 0, %s26
      %s30 = sphi 0, %s29
      %s46 = sphi 0, %s30
      %s50 = sphi 0, %s50
      %s52 = sphi 0, %s50
      %s53 = sphi 0, %s52
      %s67 = sphi 0, %s53
      %s71 = sphi 0, %s71
      %s73 = sphi 0, %s71
      %s74 = sphi 0, %s73
      %s88 = sphi 0, %s74
      %s94 = sphi 0, %s96
      %s97 = sphi 0, %s94
      %s98 = sphi 0, %s97
      %s114 = sphi 0, %s98
    $region4: #{tpu_custom_call.1} parent=1 // loop_header_branch
      %19 = sbr.rel (%p17) target = $region8
    $region5: #{tpu_custom_call.1} parent=1 // loop_body
      %s21 = ssub.s32 %s16, 1
      %s22 = ssub.s32 %s16, 2
      %s23 = sadd.s32 %s16, 1
      %s24 = ssub.s32 %s16, %s23
      %p25 = scmp.eq.s32.totalorder %s24, 0
      %s27 = sadd.s32 %s26, 1
      %s28 = scalar_select %p25, %s26, %s27
      %p31 = pneg %p25
      %p32 = scmp.eq.s32.totalorder %s16, 1
      %p33 = por %p31, %p32
      %p34 = scmp.ne.s32.totalorder %s26, %s29
      %p35 = scmp.eq.s32.totalorder %s16, 0
      %p36 = por %p34, %p35
      %p37 = scmp.ne.s32.totalorder %s26, %s29
      %p38 = scmp.eq.s32.totalorder %s21, 1
      %p39 = por %p37, %p38
      %p40 = scmp.ne.s32.totalorder %s29, %s30
      %p41 = scmp.eq.s32.totalorder %s21, 0
      %p42 = por %p40, %p41
      %p43 = scmp.ne.s32.totalorder %s29, %s30
      %p44 = scmp.eq.s32.totalorder %s22, 1
      %p45 = por %p43, %p44
      %p47 = scmp.ne.s32.totalorder %s30, %s46
      %p48 = scmp.eq.s32.totalorder %s22, 0
      %p49 = por %p47, %p48
      %s51 = sadd.s32 %s50, 1
      %p54 = scmp.eq.s32.totalorder %s16, 1
      %p55 = scmp.ne.s32.totalorder %s50, %s52
      %p56 = scmp.eq.s32.totalorder %s16, 0
      %p57 = por %p55, %p56
      %p58 = scmp.ne.s32.totalorder %s50, %s52
      %p59 = scmp.eq.s32.totalorder %s21, 1
      %p60 = por %p58, %p59
      %p61 = scmp.ne.s32.totalorder %s52, %s53
      %p62 = scmp.eq.s32.totalorder %s21, 0
      %p63 = por %p61, %p62
      %p64 = scmp.ne.s32.totalorder %s52, %s53
      %p65 = scmp.eq.s32.totalorder %s22, 1
      %p66 = por %p64, %p65
      %p68 = scmp.ne.s32.totalorder %s53, %s67
      %p69 = scmp.eq.s32.totalorder %s22, 0
      %p70 = por %p68, %p69
      %s72 = sadd.s32 %s71, 1
      %p75 = scmp.eq.s32.totalorder %s16, 1
      %p76 = scmp.ne.s32.totalorder %s71, %s73
      %p77 = scmp.eq.s32.totalorder %s16, 0
      %p78 = por %p76, %p77
      %p79 = scmp.ne.s32.totalorder %s71, %s73
      %p80 = scmp.eq.s32.totalorder %s21, 1
      %p81 = por %p79, %p80
      %p82 = scmp.ne.s32.totalorder %s73, %s74
      %p83 = scmp.eq.s32.totalorder %s21, 0
      %p84 = por %p82, %p83
      %p85 = scmp.ne.s32.totalorder %s73, %s74
      %p86 = scmp.eq.s32.totalorder %s22, 1
      %p87 = por %p85, %p86
      %p89 = scmp.ne.s32.totalorder %s74, %s88
      %p90 = scmp.eq.s32.totalorder %s22, 0
      %p91 = por %p89, %p90
      %s92 = ssub.s32 %s16, %s23
      %p93 = scmp.eq.s32.totalorder %s92, 0
      %s95 = sadd.s32 %s94, 1
      %s96 = scalar_select %p93, %s94, %s95
      %p99 = pneg %p93
      %p100 = scmp.eq.s32.totalorder %s16, 1
      %p101 = por %p99, %p100
      %p102 = scmp.ne.s32.totalorder %s94, %s97
      %p103 = scmp.eq.s32.totalorder %s16, 0
      %p104 = por %p102, %p103
      %p105 = scmp.ne.s32.totalorder %s94, %s97
      %p106 = scmp.eq.s32.totalorder %s21, 1
      %p107 = por %p105, %p106
      %p108 = scmp.ne.s32.totalorder %s97, %s98
      %p109 = scmp.eq.s32.totalorder %s21, 0
      %p110 = por %p108, %p109
      %p111 = scmp.ne.s32.totalorder %s97, %s98
      %p112 = scmp.eq.s32.totalorder %s22, 1
      %p113 = por %p111, %p112
      %p115 = scmp.ne.s32.totalorder %s98, %s114
      %p116 = scmp.eq.s32.totalorder %s22, 0
      %p117 = por %p115, %p116
      %p118 = scmp.le.s32.totalorder 1, %s16
      %p119 = scmp.lt.s32.totalorder %s16, 3
      %p120 = pnand %p118, %p119
      %p121 = pneg %p120
      // Predicated region
      $region9: #{tpu_custom_call.1} parent=5 // pred_check
        _
      $region10: #{tpu_custom_call.1} parent=5 // pred_check_branch
        %123 = sbr.rel (%p120) target = $region12
      $region11: #{tpu_custom_call.1} parent=5 // pred_region
        %s124 = ssub.s32 %s16, 1
        // Predicated region
        $region13: #{tpu_custom_call.1} parent=11 // pred_check
          %p125 = pneg %p63
        $region14: #{tpu_custom_call.1} parent=11 // pred_check_branch
          %127 = sbr.rel (%p125) target = $region16
        $region15: #{tpu_custom_call.1} parent=11 // pred_region
          %s129 = ssub.s32 4096, 4096
          %130 = vsyncadd [#allocation6], %s129
          %s131 = sshll.u32 [#allocation5], 4
          %s132 = int_to_ptr.vmem [resolvable:$true] %s131
          %137 = dma.hbm_to_vmem [thread:$0]  %s1, 4096, %s132, [#allocation6], 128, 128, 8
        $region16: #{tpu_custom_call.1} parent=11 // pred_fallthru
          _
        // Predicated region
        $region17: #{tpu_custom_call.1} parent=11 // pred_check
          %p138 = pneg %p84
        $region18: #{tpu_custom_call.1} parent=11 // pred_check_branch
          %140 = sbr.rel (%p138) target = $region20
        $region19: #{tpu_custom_call.1} parent=11 // pred_region
          _
        $region20: #{tpu_custom_call.1} parent=11 // pred_fallthru
          _
      $region12: #{tpu_custom_call.1} parent=5 // pred_fallthru
        _
      %p141 = scmp.lt.s32.totalorder %s16, 2
      // Predicated region
      $region21: #{tpu_custom_call.1} parent=5 // pred_check
        %p142 = pneg %p141
      $region22: #{tpu_custom_call.1} parent=5 // pred_check_branch
        %144 = sbr.rel (%p142) target = $region24
      $region23: #{tpu_custom_call.1} parent=5 // pred_region
        // Predicated region
        $region25: #{tpu_custom_call.1} parent=23 // pred_check
          %p145 = pneg %p36
        $region26: #{tpu_custom_call.1} parent=23 // pred_check_branch
          %147 = sbr.rel (%p145) target = $region28
        $region27: #{tpu_custom_call.1} parent=23 // pred_region
          %s148 = sand.u32 %s26, 1
          %s149 = scalar_lea.sflag [#allocation3], %s148
          %s150 = sand.u32 %s26, 1
          %s151 = smul.addr %s150, 16
          %s152 = scalar_lea.vmem [#allocation2], %s151
          %s154 = ssub.s32 256, 256
          %155 = vsyncadd %s149, %s154
          %s156 = smul.addr %s16, 2
          %s157 = smul.addr %s156, 128
          %s158 = scalar_lea.hbm %s0, %s157
          %s160 = sshll.u32 %s152, 4
          %s161 = int_to_ptr.vmem [resolvable:$true] %s160
          %163 = dma.hbm_to_vmem [thread:$0]  %s158, 256, %s161, %s149
        $region28: #{tpu_custom_call.1} parent=23 // pred_fallthru
          _
      $region24: #{tpu_custom_call.1} parent=5 // pred_fallthru
        _
      %p164 = scmp.le.s32.totalorder 1, %s16
      %p165 = scmp.lt.s32.totalorder %s16, 3
      %p166 = pnand %p164, %p165
      %p167 = pneg %p166
      // Predicated region
      $region29: #{tpu_custom_call.1} parent=5 // pred_check
        _
      $region30: #{tpu_custom_call.1} parent=5 // pred_check_branch
        %169 = sbr.rel (%p166) target = $region32
      $region31: #{tpu_custom_call.1} parent=5 // pred_region
        %s170 = ssub.s32 %s16, 1
        %s171 = sand.u32 %s29, 1
        %s172 = scalar_lea.sflag [#allocation3], %s171
        %s173 = sand.u32 %s29, 1
        %s174 = smul.addr %s173, 16
        %s175 = scalar_lea.vmem [#allocation2], %s174
        // Predicated region
        $region33: #{tpu_custom_call.1} parent=31 // pred_check
          %p176 = pneg %p42
        $region34: #{tpu_custom_call.1} parent=31 // pred_check_branch
          %178 = sbr.rel (%p176) target = $region36
        $region35: #{tpu_custom_call.1} parent=31 // pred_region
          %179 = dma.done %s172, 256
        $region36: #{tpu_custom_call.1} parent=31 // pred_fallthru
          _
        // Predicated region
        $region37: #{tpu_custom_call.1} parent=31 // pred_check
          %p180 = pneg %p63
        $region38: #{tpu_custom_call.1} parent=31 // pred_check_branch
          %182 = sbr.rel (%p180) target = $region40
        $region39: #{tpu_custom_call.1} parent=31 // pred_region
          %183 = dma.done [#allocation6], 4096
        $region40: #{tpu_custom_call.1} parent=31 // pred_fallthru
          _
        %s184 = sand.u32 %s29, 1
        %s185 = scalar_lea.sflag [#allocation3], %s184
        %s186 = sand.u32 %s29, 1
        %s187 = smul.addr %s186, 16
        %s188 = scalar_lea.vmem [#allocation2], %s187
        %p189 = pneg %p42
        %p190 = pneg %p39
        %p191 = pneg %p63
        %p192 = pneg %p60
        %p193 = pneg %p84
        %p194 = pneg %p81
        %p195 = pneg %p110
        %p196 = pneg %p107
        %s197 = sand.u32 %s97, 1
        %s198 = scalar_lea.sflag [#allocation4], %s197
        %s199 = sand.u32 %s97, 1
        %s200 = smul.addr %s199, 16
        %s201 = scalar_lea.vmem [#allocation7], %s200
        %v202 = vld [vmem:[%s175] sm:$0xff]
        %v203 = vld [vmem:[%s175 + $0x8] sm:$0xff]
        %v204 = vpack.c.bf16 %v202, %v202
        %v205 = vpack.c.bf16 %v203, %v203
        %v206 = vld [vmem:[#allocation5] sm:$0xff]
        %v207 = vld [vmem:[#allocation5 + $0x8] sm:$0xff]
        %v208 = vld [vmem:[#allocation5 + $0x10] sm:$0xff]
        %v209 = vld [vmem:[#allocation5 + $0x18] sm:$0xff]
        %v210 = vld [vmem:[#allocation5 + $0x20] sm:$0xff]
        %v211 = vld [vmem:[#allocation5 + $0x28] sm:$0xff]
        %v212 = vld [vmem:[#allocation5 + $0x30] sm:$0xff]
        %v213 = vld [vmem:[#allocation5 + $0x38] sm:$0xff]
        %v214 = vld [vmem:[#allocation5 + $0x40] sm:$0xff]
        %v215 = vld [vmem:[#allocation5 + $0x48] sm:$0xff]
        %v216 = vld [vmem:[#allocation5 + $0x50] sm:$0xff]
        %v217 = vld [vmem:[#allocation5 + $0x58] sm:$0xff]
        %v218 = vld [vmem:[#allocation5 + $0x60] sm:$0xff]
        %v219 = vld [vmem:[#allocation5 + $0x68] sm:$0xff]
        %v220 = vld [vmem:[#allocation5 + $0x70] sm:$0xff]
        %v221 = vld [vmem:[#allocation5 + $0x78] sm:$0xff]
        %v222 = vld [vmem:[#allocation5 + $0x80] sm:$0xff]
        %v223 = vld [vmem:[#allocation5 + $0x88] sm:$0xff]
        %v224 = vld [vmem:[#allocation5 + $0x90] sm:$0xff]
        %v225 = vld [vmem:[#allocation5 + $0x98] sm:$0xff]
        %v226 = vld [vmem:[#allocation5 + $0xa0] sm:$0xff]
        %v227 = vld [vmem:[#allocation5 + $0xa8] sm:$0xff]
        %v228 = vld [vmem:[#allocation5 + $0xb0] sm:$0xff]
        %v229 = vld [vmem:[#allocation5 + $0xb8] sm:$0xff]
        %v230 = vld [vmem:[#allocation5 + $0xc0] sm:$0xff]
        %v231 = vld [vmem:[#allocation5 + $0xc8] sm:$0xff]
        %v232 = vld [vmem:[#allocation5 + $0xd0] sm:$0xff]
        %v233 = vld [vmem:[#allocation5 + $0xd8] sm:$0xff]
        %v234 = vld [vmem:[#allocation5 + $0xe0] sm:$0xff]
        %v235 = vld [vmem:[#allocation5 + $0xe8] sm:$0xff]
        %v236 = vld [vmem:[#allocation5 + $0xf0] sm:$0xff]
        %v237 = vld [vmem:[#allocation5 + $0xf8] sm:$0xff]
        %v238 = vld [vmem:[%s2] sm:$0x3]
        %v240 = vlaneseq
        %v241 = vshrl.u32 %v240, 7
        %v242 = vsub.s32 0, %v241
        %v243 = vrot.slane %v238, %v242
        %v244 = vlaneseq
        %v245 = vshrl.u32 %v244, 7
        %v246 = vsub.s32 1, %v245
        %v247 = vrot.slane %v238, %v246
        %v282 = vunpack.c.l.b16 %v206
        %v283 = vunpack.c.h.b16 %v206
        %v284 = vunpack.c.l.b16 %v207
        %v285 = vunpack.c.h.b16 %v207
        %v286 = vunpack.c.l.b16 %v208
        %v287 = vunpack.c.h.b16 %v208
        %v288 = vunpack.c.l.b16 %v209
        %v289 = vunpack.c.h.b16 %v209
        %v290 = vunpack.c.l.b16 %v210
        %v291 = vunpack.c.h.b16 %v210
        %v292 = vunpack.c.l.b16 %v211
        %v293 = vunpack.c.h.b16 %v211
        %v294 = vunpack.c.l.b16 %v212
        %v295 = vunpack.c.h.b16 %v212
        %v296 = vunpack.c.l.b16 %v213
        %v297 = vunpack.c.h.b16 %v213
        %v298 = vunpack.c.l.b16 %v214
        %v299 = vunpack.c.h.b16 %v214
        %v300 = vunpack.c.l.b16 %v215
        %v301 = vunpack.c.h.b16 %v215
        %v302 = vunpack.c.l.b16 %v216
        %v303 = vunpack.c.h.b16 %v216
        %v304 = vunpack.c.l.b16 %v217
        %v305 = vunpack.c.h.b16 %v217
        %v306 = vunpack.c.l.b16 %v218
        %v307 = vunpack.c.h.b16 %v218
        %v308 = vunpack.c.l.b16 %v219
        %v309 = vunpack.c.h.b16 %v219
        %v310 = vunpack.c.l.b16 %v220
        %v311 = vunpack.c.h.b16 %v220
        %v312 = vunpack.c.l.b16 %v221
        %v313 = vunpack.c.h.b16 %v221
        %v314 = vunpack.c.l.b16 %v222
        %v315 = vunpack.c.h.b16 %v222
        %v316 = vunpack.c.l.b16 %v223
        %v317 = vunpack.c.h.b16 %v223
        %v318 = vunpack.c.l.b16 %v224
        %v319 = vunpack.c.h.b16 %v224
        %v320 = vunpack.c.l.b16 %v225
        %v321 = vunpack.c.h.b16 %v225
        %v322 = vunpack.c.l.b16 %v226
        %v323 = vunpack.c.h.b16 %v226
        %v324 = vunpack.c.l.b16 %v227
        %v325 = vunpack.c.h.b16 %v227
        %v326 = vunpack.c.l.b16 %v228
        %v327 = vunpack.c.h.b16 %v228
        %v328 = vunpack.c.l.b16 %v229
        %v329 = vunpack.c.h.b16 %v229
        %v330 = vunpack.c.l.b16 %v230
        %v331 = vunpack.c.h.b16 %v230
        %v332 = vunpack.c.l.b16 %v231
        %v333 = vunpack.c.h.b16 %v231
        %v334 = vunpack.c.l.b16 %v232
        %v335 = vunpack.c.h.b16 %v232
        %v336 = vunpack.c.l.b16 %v233
        %v337 = vunpack.c.h.b16 %v233
        %v338 = vunpack.c.l.b16 %v234
        %v339 = vunpack.c.h.b16 %v234
        %v340 = vunpack.c.l.b16 %v235
        %v341 = vunpack.c.h.b16 %v235
        %v342 = vunpack.c.l.b16 %v236
        %v343 = vunpack.c.h.b16 %v236
        %v344 = vunpack.c.l.b16 %v237
        %v345 = vunpack.c.h.b16 %v237
        %v346 = vpack.c.b16 %v284, %v282
        %v347 = vpack.c.b16 %v285, %v283
        %v348 = vpack.c.b16 %v288, %v286
        %v349 = vpack.c.b16 %v289, %v287
        %v350 = vpack.c.b16 %v292, %v290
        %v351 = vpack.c.b16 %v293, %v291
        %v352 = vpack.c.b16 %v296, %v294
        %v353 = vpack.c.b16 %v297, %v295
        %v354 = vpack.c.b16 %v300, %v298
        %v355 = vpack.c.b16 %v301, %v299
        %v356 = vpack.c.b16 %v304, %v302
        %v357 = vpack.c.b16 %v305, %v303
        %v358 = vpack.c.b16 %v308, %v306
        %v359 = vpack.c.b16 %v309, %v307
        %v360 = vpack.c.b16 %v312, %v310
        %v361 = vpack.c.b16 %v313, %v311
        %v362 = vpack.c.b16 %v316, %v314
        %v363 = vpack.c.b16 %v317, %v315
        %v364 = vpack.c.b16 %v320, %v318
        %v365 = vpack.c.b16 %v321, %v319
        %v366 = vpack.c.b16 %v324, %v322
        %v367 = vpack.c.b16 %v325, %v323
        %v368 = vpack.c.b16 %v328, %v326
        %v369 = vpack.c.b16 %v329, %v327
        %v370 = vpack.c.b16 %v332, %v330
        %v371 = vpack.c.b16 %v333, %v331
        %v372 = vpack.c.b16 %v336, %v334
        %v373 = vpack.c.b16 %v337, %v335
        %v374 = vpack.c.b16 %v340, %v338
        %v375 = vpack.c.b16 %v341, %v339
        %v376 = vpack.c.b16 %v344, %v342
        %v377 = vpack.c.b16 %v345, %v343
        %410 = vmatprep.subr.bf16.mxu0 %v347
        %411 = vmatpush1.bf16.msra.mxu0 %v346
        %412 = vmatprep.subr.bf16.mxu0 %v349
        %413 = vmatpush1.bf16.msra.mxu0 %v348
        %414 = vmatprep.subr.bf16.mxu0 %v351
        %415 = vmatpush1.bf16.msra.mxu0 %v350
        %416 = vmatprep.subr.bf16.mxu0 %v353
        %417 = vmatpush1.bf16.msra.mxu0 %v352
        %418 = vmatprep.subr.bf16.mxu0 %v355
        %419 = vmatpush1.bf16.msra.mxu0 %v354
        %420 = vmatprep.subr.bf16.mxu0 %v357
        %421 = vmatpush1.bf16.msra.mxu0 %v356
        %422 = vmatprep.subr.bf16.mxu0 %v359
        %423 = vmatpush1.bf16.msra.mxu0 %v358
        %424 = vmatprep.subr.bf16.mxu0 %v361
        %425 = vmatpush1.bf16.msra.mxu0 %v360
        %426 = vmatprep.subr.bf16.mxu0 %v363
        %427 = vmatpush1.bf16.msra.mxu0 %v362
        %428 = vmatprep.subr.bf16.mxu0 %v365
        %429 = vmatpush1.bf16.msra.mxu0 %v364
        %430 = vmatprep.subr.bf16.mxu0 %v367
        %431 = vmatpush1.bf16.msra.mxu0 %v366
        %432 = vmatprep.subr.bf16.mxu0 %v369
        %433 = vmatpush1.bf16.msra.mxu0 %v368
        %434 = vmatprep.subr.bf16.mxu0 %v371
        %435 = vmatpush1.bf16.msra.mxu0 %v370
        %436 = vmatprep.subr.bf16.mxu0 %v373
        %437 = vmatpush1.bf16.msra.mxu0 %v372
        %438 = vmatprep.subr.bf16.mxu0 %v375
        %439 = vmatpush1.bf16.msra.mxu0 %v374
        %440 = vmatprep.subr.bf16.mxu0 %v377
        %441 = vmatpush1.bf16.msra.mxu0 %v376
        %442 = vmatprep.mubr.bf16.mxu0 %v205
        %443 = vmatmul.mubr.bf16.gmra.mrb[0].mxu0 %v204
        %v444 = vpop.f32.mrb[0].mxu0
        %v445 = vadd.f32 %v243, %v444
        %v446 = vpop.f32.mrb[0].mxu0
        %v447 = vadd.f32 %v247, %v446
        %v448 = vpop.f32.mrb[0].mxu0
        %v449 = vpop.f32.mrb[0].mxu0
        %450 = vdwg.mxu0
        %451 = vst [vmem:[%s201] sm:$0xff] %v445
        %vm452 = vcmask 1039360
        %453 = vst.msk [vmem:[%s201 + $0x8] sm:$0xff] %vm452, %v447
        %s454 = sand.u32 %s97, 1
        %s455 = scalar_lea.sflag [#allocation4], %s454
        %s456 = sand.u32 %s97, 1
        %s457 = smul.addr %s456, 16
        %s458 = scalar_lea.vmem [#allocation7], %s457
        // Predicated region
        $region41: #{tpu_custom_call.1} parent=31 // pred_check
          %p459 = pneg %p107
        $region42: #{tpu_custom_call.1} parent=31 // pred_check_branch
          %461 = sbr.rel (%p459) target = $region44
        $region43: #{tpu_custom_call.1} parent=31 // pred_region
          %s463 = ssub.s32 256, 256
          %464 = vsyncadd %s455, %s463
          %s465 = smul.addr %s21, 2
          %s466 = smul.addr %s465, 128
          %s467 = scalar_lea.hbm %s3, %s466
          %s469 = sshll.u32 %s458, 4
          %s470 = int_to_ptr.vmem [resolvable:$true] %s469
          %472 = dma.vmem_to_hbm [thread:$0]  %s470, 256, %s467, %s455
        $region44: #{tpu_custom_call.1} parent=31 // pred_fallthru
          _
      $region32: #{tpu_custom_call.1} parent=5 // pred_fallthru
        _
      %p473 = scmp.le.s32.totalorder 2, %s16
      // Predicated region
      $region45: #{tpu_custom_call.1} parent=5 // pred_check
        %p474 = pneg %p473
      $region46: #{tpu_custom_call.1} parent=5 // pred_check_branch
        %476 = sbr.rel (%p474) target = $region48
      $region47: #{tpu_custom_call.1} parent=5 // pred_region
        %s477 = ssub.s32 %s16, 2
        // Predicated region
        $region49: #{tpu_custom_call.1} parent=47 // pred_check
          %p478 = pneg %p113
        $region50: #{tpu_custom_call.1} parent=47 // pred_check_branch
          %480 = sbr.rel (%p478) target = $region52
        $region51: #{tpu_custom_call.1} parent=47 // pred_region
          %s481 = sand.u32 %s98, 1
          %s482 = scalar_lea.sflag [#allocation4], %s481
          %s483 = sand.u32 %s98, 1
          %s484 = smul.addr %s483, 16
          %s485 = scalar_lea.vmem [#allocation7], %s484
          %486 = dma.done %s482, 256
        $region52: #{tpu_custom_call.1} parent=47 // pred_fallthru
          _
      $region48: #{tpu_custom_call.1} parent=5 // pred_fallthru
        _
    $region6: #{tpu_custom_call.1} parent=1 // loop_footer
      %s20 = sadd.s32 1, %s16
    $region7: #{tpu_custom_call.1} parent=1 // loop_footer_branch
      %15 = sbr.rel target = $region3
    $region8: #{tpu_custom_call.1} parent=1 // loop_exit
      _
    %487 = vsyncpa [#allocation3], 1
    %s488 = scalar_lea.sflag [#allocation3], 1
    %489 = vsyncpa %s488, 1
    %490 = vsyncpa [#allocation6], 1
    %491 = vsyncpa [#allocation4], 1
    %s492 = scalar_lea.sflag [#allocation4], 1
    %493 = vsyncpa %s492, 1

</llo_original>
